<compile_context>
chip_gen: v5e
topology: v5e:2x2
jax: 0.10.0
libtpu: 0.0.40
codegen_flags: <defaults>
</compile_context>

<pallas_src>
import functools

import jax
import jax.numpy as jnp
from jax.experimental import pallas as pl
from jax.experimental.pallas import tpu as pltpu

# Safe scoped-VMEM budget on every generation (v5e/v6e: 128 MiB, v7x: 64 MiB).
_VMEM_LIMIT_BYTES = 48 * 1024 * 1024


def _round_up(x, m):
    return ((x + m - 1) // m) * m


def _pick_row_tile(rows, requested):
    """Largest row tile <= requested, multiple of 8 sublanes, not bigger than
    the (8-rounded) row count so small inputs don't over-pad."""
    t = min(requested, _round_up(rows, 8))
    return _round_up(t, 8)


def _pick_n_tile(dim_out, requested):
    """Lane-dense N tile: multiple of 128 when possible, else full dim_out."""
    if dim_out % requested == 0:
        return requested
    if dim_out % 128 == 0:
        return 128
    return dim_out


# ---------------------------------------------------------------------------
# Standalone LayerNorm kernel (used when the injected `fn` is arbitrary).
# ---------------------------------------------------------------------------
def _layernorm_kernel(x_ref, g_ref, b_ref, o_ref, *, eps, inv_dim):
    # x_ref: (tile_rows, dim), g_ref/b_ref: (1, dim)
    x = x_ref[...].astype(jnp.float32)
    mean = jnp.sum(x, axis=-1, keepdims=True) * inv_dim        # XLU reduce + VPU mul
    centered = x - mean
    var = jnp.sum(centered * centered, axis=-1, keepdims=True) * inv_dim
    y = centered * jax.lax.rsqrt(var + eps)                    # rsqrt -> EUP
    y = y * g_ref[...].astype(jnp.float32) + b_ref[...].astype(jnp.float32)
    o_ref[...] = y.astype(o_ref.dtype)


def layernorm_pallas(x, gamma, beta, *, eps=1e-5, tile_rows=512):
    """LayerNorm over the last axis, matching torch.nn.LayerNorm(dim)."""
    orig_shape = x.shape
    dim = orig_shape[-1]
    x2 = x.reshape(-1, dim)
    rows = x2.shape[0]

    tm = _pick_row_tile(rows, tile_rows)
    rows_p = _round_up(rows, tm)
    if rows_p != rows:
        x2 = jnp.pad(x2, ((0, rows_p - rows), (0, 0)))

    g2 = gamma.reshape(1, dim)
    b2 = beta.reshape(1, dim)

    kernel = functools.partial(_layernorm_kernel, eps=eps, inv_dim=1.0 / dim)
    out = pl.pallas_call(
        kernel,
        out_shape=jax.ShapeDtypeStruct((rows_p, dim), x.dtype),
        grid_spec=pltpu.PrefetchScalarGridSpec(
            num_scalar_prefetch=0,
            grid=(rows_p // tm,),
            in_specs=[
                pl.BlockSpec((tm, dim), lambda i: (i, 0)),
                pl.BlockSpec((1, dim), lambda i: (0, 0)),   # gamma resident
                pl.BlockSpec((1, dim), lambda i: (0, 0)),   # beta resident
            ],
            out_specs=pl.BlockSpec((tm, dim), lambda i: (i, 0)),
        ),
        compiler_params=pltpu.CompilerParams(
            dimension_semantics=("parallel",),
            vmem_limit_bytes=_VMEM_LIMIT_BYTES),
    )(x2, g2, b2)

    if rows_p != rows:
        out = out[:rows]
    return out.reshape(orig_shape)


# ---------------------------------------------------------------------------
# Fused PreNorm + Linear kernel: normalize the x tile in-VMEM, then matmul it
# with an N-tile of the weight on the MXU. No HBM round-trip for x_norm.
# ---------------------------------------------------------------------------
def _prenorm_linear_kernel(x_ref, g_ref, b_ref, w_ref, bias_ref, o_ref,
                           *, eps, inv_dim):
    # x_ref: (tm, dim), g/b: (1, dim), w_ref: (dim, tn), bias: (1, tn)
    x = x_ref[...].astype(jnp.float32)
    mean = jnp.sum(x, axis=-1, keepdims=True) * inv_dim
    centered = x - mean
    var = jnp.sum(centered * centered, axis=-1, keepdims=True) * inv_dim
    xn = centered * jax.lax.rsqrt(var + eps)
    xn = xn * g_ref[...].astype(jnp.float32) + b_ref[...].astype(jnp.float32)
    # LN VPU/XLU/EUP work hides under the MXU matmul.
    y = jnp.dot(xn.astype(w_ref.dtype), w_ref[...],
                preferred_element_type=jnp.float32)
    o_ref[...] = (y + bias_ref[...].astype(jnp.float32)).astype(o_ref.dtype)


def prenorm_linear_pallas(x, gamma, beta, w, bias, *, eps=1e-5,
                          tile_rows=256, tile_n=256):
    """Fused LayerNorm(x) @ w + bias over the last axis."""
    orig_shape = x.shape
    dim = orig_shape[-1]
    dim_out = w.shape[1]
    x2 = x.reshape(-1, dim)
    rows = x2.shape[0]

    tm = _pick_row_tile(rows, tile_rows)
    rows_p = _round_up(rows, tm)
    if rows_p != rows:
        x2 = jnp.pad(x2, ((0, rows_p - rows), (0, 0)))
    tn = _pick_n_tile(dim_out, tile_n)

    g2 = gamma.reshape(1, dim)
    b2 = beta.reshape(1, dim)
    bias2 = bias.reshape(1, dim_out)

    kernel = functools.partial(_prenorm_linear_kernel, eps=eps,
                               inv_dim=1.0 / dim)
    out = pl.pallas_call(
        kernel,
        out_shape=jax.ShapeDtypeStruct((rows_p, dim_out), x.dtype),
        grid_spec=pltpu.PrefetchScalarGridSpec(
            num_scalar_prefetch=0,
            grid=(rows_p // tm, dim_out // tn),
            in_specs=[
                # x tile is constant across the (inner) N axis -> reused, no re-DMA.
                pl.BlockSpec((tm, dim), lambda i, j: (i, 0)),
                pl.BlockSpec((1, dim), lambda i, j: (0, 0)),    # gamma resident
                pl.BlockSpec((1, dim), lambda i, j: (0, 0)),    # beta resident
                pl.BlockSpec((dim, tn), lambda i, j: (0, j)),   # weight N-tile
                pl.BlockSpec((1, tn), lambda i, j: (0, j)),     # bias N-tile
            ],
            out_specs=pl.BlockSpec((tm, tn), lambda i, j: (i, j)),
        ),
        compiler_params=pltpu.CompilerParams(
            dimension_semantics=("parallel", "parallel"),
            vmem_limit_bytes=_VMEM_LIMIT_BYTES),
    )(x2, g2, b2, w, bias2)

    if rows_p != rows:
        out = out[:rows]
    return out.reshape(orig_shape[:-1] + (dim_out,))


# ---------------------------------------------------------------------------
# PreNorm wrapper: LayerNorm, then apply injected fn. If fn is a Linear, the
# two are fused into a single pallas_call.
# ---------------------------------------------------------------------------
class LinearParams:
    """Marker for a Linear `fn` so PreNormPallas can use the fused kernel."""

    def __init__(self, w, b):
        self.w = w
        self.b = b

    def __call__(self, x):
        # Unfused fallback (kept for completeness; PreNormPallas fuses instead).
        return prenorm_linear_pallas(x, jnp.ones((x.shape[-1],), x.dtype),
                                     jnp.zeros((x.shape[-1],), x.dtype),
                                     self.w, self.b)


class PreNormPallas:
    """PreNorm: x = LayerNorm(x); return fn(x, *args, **kwargs)."""

    def __init__(self, dim, fn, gamma, beta, eps=1e-5):
        self.dim = dim
        self.fn = fn
        self.gamma = gamma
        self.beta = beta
        self.eps = eps

    def __call__(self, x, *args, **kwargs):
        if isinstance(self.fn, LinearParams):
            # Fused LayerNorm + Linear: single kernel, single pass over x.
            return prenorm_linear_pallas(x, self.gamma, self.beta,
                                         self.fn.w, self.fn.b, eps=self.eps)
        # Generic fn (e.g. a conv FFN): standalone LN kernel, then fn.
        x = layernorm_pallas(x, self.gamma, self.beta, eps=self.eps)
        return self.fn(x, *args, **kwargs)


if __name__ == "__main__":
    key = jax.random.PRNGKey(0)
    k_x, k_w, k_b = jax.random.split(key, 3)

    # Shapes consistent with the module: PreNorm acts on [b, h, w, c] with c=dim.
    B, H, W, D = 2, 8, 8, 32
    D_OUT = 32

    x = jax.random.normal(k_x, (B, H, W, D), dtype=jnp.float32)

    # LayerNorm params (torch default init: weight=1, bias=0).
    gamma = jnp.ones((D,), dtype=jnp.float32)
    beta = jnp.zeros((D,), dtype=jnp.float32)

    # Example injected `fn`: a Linear(D -> D_OUT) layer (fused into the kernel).
    w_fn = jax.random.normal(k_w, (D, D_OUT), dtype=jnp.float32) * 0.02
    b_fn = jax.random.normal(k_b, (D_OUT,), dtype=jnp.float32) * 0.02

    prenorm = PreNormPallas(D, LinearParams(w_fn, b_fn), gamma, beta)
    out = prenorm(x)
    out = jax.block_until_ready(out)

    # Also exercise the generic (unfused) path: LN kernel + plain-JAX fn.
    prenorm_generic = PreNormPallas(D, lambda y: y @ w_fn + b_fn, gamma, beta)
    out_generic = jax.block_until_ready(prenorm_generic(x))

    # Reference (plain JAX) for the PreNorm forward.
    mu = jnp.mean(x, axis=-1, keepdims=True)
    var = jnp.mean((x - mu) ** 2, axis=-1, keepdims=True)
    xn = (x - mu) / jnp.sqrt(var + 1e-5) * gamma + beta
    ref = xn @ w_fn + b_fn

    assert out.shape == ref.shape
    assert jnp.allclose(out, ref, atol=1e-4, rtol=1e-4), "fused mismatch vs reference"
    assert jnp.allclose(out_generic, ref, atol=1e-4, rtol=1e-4), "LN mismatch vs reference"

    print("KERNEL_OK")
</pallas_src>

<mosaic_0001>
module attributes {stable_mosaic.version = 11 : i64} {
  func.func @_prenorm_linear_kernel(%arg0: i32, %arg1: i32, %arg2: memref<128x32xf32, #tpu.memory_space<vmem>>, %arg3: memref<1x32xf32, #tpu.memory_space<vmem>>, %arg4: memref<1x32xf32, #tpu.memory_space<vmem>>, %arg5: memref<32x32xf32, #tpu.memory_space<vmem>>, %arg6: memref<1x32xf32, #tpu.memory_space<vmem>>, %arg7: memref<128x32xf32, #tpu.memory_space<vmem>>) attributes {dimension_semantics = [#tpu.dimension_semantics<parallel>, #tpu.dimension_semantics<parallel>], iteration_bounds = array<i64: 1, 1>, scalar_prefetch = 0 : i64, scratch_operands = 0 : i64, tpu.core_type = #tpu.core_type<tc>, window_params = [{transform_indices = @transform_0, window_bounds = array<i64: 128, 32>}, {pipeline_mode = #tpu.pipeline_mode<synchronous>, transform_indices = @transform_1, window_bounds = array<i64: 1, 32>}, {pipeline_mode = #tpu.pipeline_mode<synchronous>, transform_indices = @transform_2, window_bounds = array<i64: 1, 32>}, {transform_indices = @transform_3, window_bounds = array<i64: 32, 32>}, {transform_indices = @transform_4, window_bounds = array<i64: 1, 32>}, {transform_indices = @transform_5, window_bounds = array<i64: 128, 32>}]} {
    %c0 = arith.constant 0 : index
    %c0_0 = arith.constant 0 : index
    %0 = vector.load %arg2[%c0, %c0_0] : memref<128x32xf32, #tpu.memory_space<vmem>>, vector<128x32xf32>
    %cst = arith.constant dense<0.000000e+00> : vector<128xf32>
    %1 = vector.multi_reduction <add>, %0, %cst [1] : vector<128x32xf32> to vector<128xf32>
    %2 = vector.shape_cast %1 : vector<128xf32> to vector<128x1xf32>
    %cst_1 = arith.constant 3.125000e-02 : f32
    %3 = vector.broadcast %cst_1 : f32 to vector<128x1xf32>
    %4 = arith.mulf %2, %3 : vector<128x1xf32>
    %5 = vector.broadcast %4 : vector<128x1xf32> to vector<128x32xf32>
    %6 = arith.subf %0, %5 : vector<128x32xf32>
    %7 = arith.mulf %6, %6 : vector<128x32xf32>
    %cst_2 = arith.constant dense<0.000000e+00> : vector<128xf32>
    %8 = vector.multi_reduction <add>, %7, %cst_2 [1] : vector<128x32xf32> to vector<128xf32>
    %9 = vector.shape_cast %8 : vector<128xf32> to vector<128x1xf32>
    %cst_3 = arith.constant 3.125000e-02 : f32
    %10 = vector.broadcast %cst_3 : f32 to vector<128x1xf32>
    %11 = arith.mulf %9, %10 : vector<128x1xf32>
    %cst_4 = arith.constant 9.99999974E-6 : f32
    %12 = vector.broadcast %cst_4 : f32 to vector<128x1xf32>
    %13 = arith.addf %11, %12 : vector<128x1xf32>
    %14 = math.rsqrt %13 : vector<128x1xf32>
    %15 = vector.broadcast %14 : vector<128x1xf32> to vector<128x32xf32>
    %16 = arith.mulf %6, %15 : vector<128x32xf32>
    %c0_5 = arith.constant 0 : index
    %c0_6 = arith.constant 0 : index
    %17 = vector.load %arg3[%c0_5, %c0_6] : memref<1x32xf32, #tpu.memory_space<vmem>>, vector<1x32xf32>
    %18 = vector.broadcast %17 : vector<1x32xf32> to vector<128x32xf32>
    %19 = arith.mulf %16, %18 : vector<128x32xf32>
    %c0_7 = arith.constant 0 : index
    %c0_8 = arith.constant 0 : index
    %20 = vector.load %arg4[%c0_7, %c0_8] : memref<1x32xf32, #tpu.memory_space<vmem>>, vector<1x32xf32>
    %21 = vector.broadcast %20 : vector<1x32xf32> to vector<128x32xf32>
    %22 = arith.addf %19, %21 : vector<128x32xf32>
    %c0_9 = arith.constant 0 : index
    %c0_10 = arith.constant 0 : index
    %23 = vector.load %arg5[%c0_9, %c0_10] : memref<32x32xf32, #tpu.memory_space<vmem>>, vector<32x32xf32>
    %cst_11 = arith.constant dense<0.000000e+00> : vector<128x32xf32>
    %24 = tpu.matmul %22, %23, %cst_11 {dimension_numbers = #tpu.dot_dimension_numbers<[1], [0], [0], [1], [0, 0, 1, 1], [], []>} : vector<128x32xf32>, vector<32x32xf32>, vector<128x32xf32> -> vector<128x32xf32>
    %c0_12 = arith.constant 0 : index
    %c0_13 = arith.constant 0 : index
    %25 = vector.load %arg6[%c0_12, %c0_13] : memref<1x32xf32, #tpu.memory_space<vmem>>, vector<1x32xf32>
    %26 = vector.broadcast %25 : vector<1x32xf32> to vector<128x32xf32>
    %27 = arith.addf %24, %26 : vector<128x32xf32>
    %c0_14 = arith.constant 0 : index
    %c0_15 = arith.constant 0 : index
    %28 = vector.load %arg7[%c0_14, %c0_15] : memref<128x32xf32, #tpu.memory_space<vmem>>, vector<128x32xf32>
    tpu.vector_store %arg7[%c0_14, %c0_15], %27 {strides = array<i32>} : memref<128x32xf32, #tpu.memory_space<vmem>>, vector<128x32xf32>,
    return
  }
  func.func @transform_0(%arg0: i32, %arg1: i32) -> (i32, i32) {
    %c0_i32 = arith.constant 0 : i32
    %c0_i32_0 = arith.constant 0 : i32
    return %arg0, %c0_i32 : i32, i32
  }
  func.func @transform_1(%arg0: i32, %arg1: i32) -> (i32, i32) {
    %c0_i32 = arith.constant 0 : i32
    %c0_i32_0 = arith.constant 0 : i32
    %c0_i32_1 = arith.constant 0 : i32
    return %c0_i32, %c0_i32_0 : i32, i32
  }
  func.func @transform_2(%arg0: i32, %arg1: i32) -> (i32, i32) {
    %c0_i32 = arith.constant 0 : i32
    %c0_i32_0 = arith.constant 0 : i32
    %c0_i32_1 = arith.constant 0 : i32
    return %c0_i32, %c0_i32_0 : i32, i32
  }
  func.func @transform_3(%arg0: i32, %arg1: i32) -> (i32, i32) {
    %c0_i32 = arith.constant 0 : i32
    %c0_i32_0 = arith.constant 0 : i32
    return %c0_i32, %arg1 : i32, i32
  }
  func.func @transform_4(%arg0: i32, %arg1: i32) -> (i32, i32) {
    %c0_i32 = arith.constant 0 : i32
    %c0_i32_0 = arith.constant 0 : i32
    return %c0_i32, %arg1 : i32, i32
  }
  func.func @transform_5(%arg0: i32, %arg1: i32) -> (i32, i32) {
    %c0_i32 = arith.constant 0 : i32
    return %arg0, %arg1 : i32, i32
  }
}

</mosaic_0001>

<llo_original>
// kernel: tpu_custom_call.1
$region0: #{tpu_custom_call.1}
  #allocation0 [shape = 'u32[]', space=smem, size = 0x4, offset = 0x4, fixed_abs, tag = 'smem constant byte address 0x4 - core index']
  #allocation1 [shape = 'u32[72,128]{1,0:T(1,128)}', space=vmem, size = 0x9000, scoped, tag = 'internal scratch']
  %s0 = inlined_call_operand.vmem [shape: f32[128,32], index: 0, kind: input, shape index: {}]
  %s1 = inlined_call_operand.vmem [shape: f32[1,32], index: 1, kind: input, shape index: {}]
  %s2 = inlined_call_operand.vmem [shape: f32[1,32], index: 2, kind: input, shape index: {}]
  %s3 = inlined_call_operand.vmem [shape: f32[32,32], index: 3, kind: input, shape index: {}]
  %s4 = inlined_call_operand.vmem [shape: f32[1,32], index: 4, kind: input, shape index: {}]
  %s5 = inlined_call_operand.vmem [shape: f32[128,32], index: 5, kind: output, shape index: {}]
  %s6 = sld [smem:[#allocation0]]
  $region30: #{tpu_custom_call.1} parent=0
    _
  %s8 = ssub.s32 1, %s6
  %s9 = scalar_select 0, %s8, %s6
  // Predicated region
  $region2: #{tpu_custom_call.1} parent=0 // pred_check
    _
  $region3: #{tpu_custom_call.1} parent=0 // pred_check_branch
    %11 = sbr.rel (0) target = $region5
  $region4: #{tpu_custom_call.1} parent=0 // pred_region
    _
  $region5: #{tpu_custom_call.1} parent=0 // pred_fallthru
    _
  // Predicated region
  $region6: #{tpu_custom_call.1} parent=0 // pred_check
    _
  $region7: #{tpu_custom_call.1} parent=0 // pred_check_branch
    %13 = sbr.rel (0) target = $region9
  $region8: #{tpu_custom_call.1} parent=0 // pred_region
    _
  $region9: #{tpu_custom_call.1} parent=0 // pred_fallthru
    _
  // Predicated region
  $region10: #{tpu_custom_call.1} parent=0 // pred_check
    _
  $region11: #{tpu_custom_call.1} parent=0 // pred_check_branch
    %15 = sbr.rel (0) target = $region13
  $region12: #{tpu_custom_call.1} parent=0 // pred_region
    _
  $region13: #{tpu_custom_call.1} parent=0 // pred_fallthru
    _
  // Predicated region
  $region14: #{tpu_custom_call.1} parent=0 // pred_check
    _
  $region15: #{tpu_custom_call.1} parent=0 // pred_check_branch
    %17 = sbr.rel (0) target = $region17
  $region16: #{tpu_custom_call.1} parent=0 // pred_region
    _
  $region17: #{tpu_custom_call.1} parent=0 // pred_fallthru
    _
  // Predicated region
  $region18: #{tpu_custom_call.1} parent=0 // pred_check
    _
  $region19: #{tpu_custom_call.1} parent=0 // pred_check_branch
    %19 = sbr.rel (0) target = $region21
  $region20: #{tpu_custom_call.1} parent=0 // pred_region
    _
  $region21: #{tpu_custom_call.1} parent=0 // pred_fallthru
    _
  %v20 = vld [vmem:[%s0] sm:$0xff]
  %v21 = vld [vmem:[%s0 + $0x8] sm:$0xff]
  %v22 = vld [vmem:[%s0 + $0x10] sm:$0xff]
  %v23 = vld [vmem:[%s0 + $0x18] sm:$0xff]
  %v24 = vld [vmem:[%s0 + $0x20] sm:$0xff]
  %v25 = vld [vmem:[%s0 + $0x28] sm:$0xff]
  %v26 = vld [vmem:[%s0 + $0x30] sm:$0xff]
  %v27 = vld [vmem:[%s0 + $0x38] sm:$0xff]
  %v28 = vld [vmem:[%s0 + $0x40] sm:$0xff]
  %v29 = vld [vmem:[%s0 + $0x48] sm:$0xff]
  %v30 = vld [vmem:[%s0 + $0x50] sm:$0xff]
  %v31 = vld [vmem:[%s0 + $0x58] sm:$0xff]
  %v32 = vld [vmem:[%s0 + $0x60] sm:$0xff]
  %v33 = vld [vmem:[%s0 + $0x68] sm:$0xff]
  %v34 = vld [vmem:[%s0 + $0x70] sm:$0xff]
  %v35 = vld [vmem:[%s0 + $0x78] sm:$0xff]
  %vm36 = vcmask 261120
  %v37 = vsel %vm36, %v20, 0.0
  %38 = vadd.xlane.f32.xlu0 %v37
  %v39 = vpop.xlane.xlu0 %38
  %v40 = vsel %vm36, %v21, 0.0
  %41 = vadd.xlane.f32.xlu0 %v40
  %v42 = vpop.xlane.xlu0 %41
  %v43 = vsel %vm36, %v22, 0.0
  %44 = vadd.xlane.f32.xlu0 %v43
  %v45 = vpop.xlane.xlu0 %44
  %v46 = vsel %vm36, %v23, 0.0
  %47 = vadd.xlane.f32.xlu0 %v46
  %v48 = vpop.xlane.xlu0 %47
  %v49 = vsel %vm36, %v24, 0.0
  %50 = vadd.xlane.f32.xlu0 %v49
  %v51 = vpop.xlane.xlu0 %50
  %v52 = vsel %vm36, %v25, 0.0
  %53 = vadd.xlane.f32.xlu0 %v52
  %v54 = vpop.xlane.xlu0 %53
  %v55 = vsel %vm36, %v26, 0.0
  %56 = vadd.xlane.f32.xlu0 %v55
  %v57 = vpop.xlane.xlu0 %56
  %v58 = vsel %vm36, %v27, 0.0
  %59 = vadd.xlane.f32.xlu0 %v58
  %v60 = vpop.xlane.xlu0 %59
  %v61 = vsel %vm36, %v28, 0.0
  %62 = vadd.xlane.f32.xlu0 %v61
  %v63 = vpop.xlane.xlu0 %62
  %v64 = vsel %vm36, %v29, 0.0
  %65 = vadd.xlane.f32.xlu0 %v64
  %v66 = vpop.xlane.xlu0 %65
  %v67 = vsel %vm36, %v30, 0.0
  %68 = vadd.xlane.f32.xlu0 %v67
  %v69 = vpop.xlane.xlu0 %68
  %v70 = vsel %vm36, %v31, 0.0
  %71 = vadd.xlane.f32.xlu0 %v70
  %v72 = vpop.xlane.xlu0 %71
  %v73 = vsel %vm36, %v32, 0.0
  %74 = vadd.xlane.f32.xlu0 %v73
  %v75 = vpop.xlane.xlu0 %74
  %v76 = vsel %vm36, %v33, 0.0
  %77 = vadd.xlane.f32.xlu0 %v76
  %v78 = vpop.xlane.xlu0 %77
  %v79 = vsel %vm36, %v34, 0.0
  %80 = vadd.xlane.f32.xlu0 %v79
  %v81 = vpop.xlane.xlu0 %80
  %v82 = vsel %vm36, %v35, 0.0
  %83 = vadd.xlane.f32.xlu0 %v82
  %v84 = vpop.xlane.xlu0 %83
  %v85 = vmul.f32 %v39, 0.03125
  %v86 = vmul.f32 %v42, 0.03125
  %v87 = vmul.f32 %v45, 0.03125
  %v88 = vmul.f32 %v48, 0.03125
  %v89 = vmul.f32 %v51, 0.03125
  %v90 = vmul.f32 %v54, 0.03125
  %v91 = vmul.f32 %v57, 0.03125
  %v92 = vmul.f32 %v60, 0.03125
  %v93 = vmul.f32 %v63, 0.03125
  %v94 = vmul.f32 %v66, 0.03125
  %v95 = vmul.f32 %v69, 0.03125
  %v96 = vmul.f32 %v72, 0.03125
  %v97 = vmul.f32 %v75, 0.03125
  %v98 = vmul.f32 %v78, 0.03125
  %v99 = vmul.f32 %v81, 0.03125
  %v100 = vmul.f32 %v84, 0.03125
  %v101 = vsub.f32 %v20, %v85
  %v102 = vsub.f32 %v21, %v86
  %v103 = vsub.f32 %v22, %v87
  %v104 = vsub.f32 %v23, %v88
  %v105 = vsub.f32 %v24, %v89
  %v106 = vsub.f32 %v25, %v90
  %v107 = vsub.f32 %v26, %v91
  %v108 = vsub.f32 %v27, %v92
  %v109 = vsub.f32 %v28, %v93
  %v110 = vsub.f32 %v29, %v94
  %v111 = vsub.f32 %v30, %v95
  %v112 = vsub.f32 %v31, %v96
  %v113 = vsub.f32 %v32, %v97
  %v114 = vsub.f32 %v33, %v98
  %v115 = vsub.f32 %v34, %v99
  %v116 = vsub.f32 %v35, %v100
  %v117 = vmul.f32 %v101, %v101
  %v118 = vmul.f32 %v102, %v102
  %v119 = vmul.f32 %v103, %v103
  %v120 = vmul.f32 %v104, %v104
  %v121 = vmul.f32 %v105, %v105
  %v122 = vmul.f32 %v106, %v106
  %v123 = vmul.f32 %v107, %v107
  %v124 = vmul.f32 %v108, %v108
  %v125 = vmul.f32 %v109, %v109
  %v126 = vmul.f32 %v110, %v110
  %v127 = vmul.f32 %v111, %v111
  %v128 = vmul.f32 %v112, %v112
  %v129 = vmul.f32 %v113, %v113
  %v130 = vmul.f32 %v114, %v114
  %v131 = vmul.f32 %v115, %v115
  %v132 = vmul.f32 %v116, %v116
  %v133 = vsel %vm36, %v117, 0.0
  %134 = vadd.xlane.f32.xlu0 %v133
  %v135 = vpop.xlane.xlu0 %134
  %v136 = vsel %vm36, %v118, 0.0
  %137 = vadd.xlane.f32.xlu0 %v136
  %v138 = vpop.xlane.xlu0 %137
  %v139 = vsel %vm36, %v119, 0.0
  %140 = vadd.xlane.f32.xlu0 %v139
  %v141 = vpop.xlane.xlu0 %140
  %v142 = vsel %vm36, %v120, 0.0
  %143 = vadd.xlane.f32.xlu0 %v142
  %v144 = vpop.xlane.xlu0 %143
  %v145 = vsel %vm36, %v121, 0.0
  %146 = vadd.xlane.f32.xlu0 %v145
  %v147 = vpop.xlane.xlu0 %146
  %v148 = vsel %vm36, %v122, 0.0
  %149 = vadd.xlane.f32.xlu0 %v148
  %v150 = vpop.xlane.xlu0 %149
  %v151 = vsel %vm36, %v123, 0.0
  %152 = vadd.xlane.f32.xlu0 %v151
  %v153 = vpop.xlane.xlu0 %152
  %v154 = vsel %vm36, %v124, 0.0
  %155 = vadd.xlane.f32.xlu0 %v154
  %v156 = vpop.xlane.xlu0 %155
  %v157 = vsel %vm36, %v125, 0.0
  %158 = vadd.xlane.f32.xlu0 %v157
  %v159 = vpop.xlane.xlu0 %158
  %v160 = vsel %vm36, %v126, 0.0
  %161 = vadd.xlane.f32.xlu0 %v160
  %v162 = vpop.xlane.xlu0 %161
  %v163 = vsel %vm36, %v127, 0.0
  %164 = vadd.xlane.f32.xlu0 %v163
  %v165 = vpop.xlane.xlu0 %164
  %v166 = vsel %vm36, %v128, 0.0
  %167 = vadd.xlane.f32.xlu0 %v166
  %v168 = vpop.xlane.xlu0 %167
  %v169 = vsel %vm36, %v129, 0.0
  %170 = vadd.xlane.f32.xlu0 %v169
  %v171 = vpop.xlane.xlu0 %170
  %v172 = vsel %vm36, %v130, 0.0
  %173 = vadd.xlane.f32.xlu0 %v172
  %v174 = vpop.xlane.xlu0 %173
  %v175 = vsel %vm36, %v131, 0.0
  %176 = vadd.xlane.f32.xlu0 %v175
  %v177 = vpop.xlane.xlu0 %176
  %v178 = vsel %vm36, %v132, 0.0
  %179 = vadd.xlane.f32.xlu0 %v178
  %v180 = vpop.xlane.xlu0 %179
  %v181 = vmul.f32 %v135, 0.03125
  %v182 = vmul.f32 %v138, 0.03125
  %v183 = vmul.f32 %v141, 0.03125
  %v184 = vmul.f32 %v144, 0.03125
  %v185 = vmul.f32 %v147, 0.03125
  %v186 = vmul.f32 %v150, 0.03125
  %v187 = vmul.f32 %v153, 0.03125
  %v188 = vmul.f32 %v156, 0.03125
  %v189 = vmul.f32 %v159, 0.03125
  %v190 = vmul.f32 %v162, 0.03125
  %v191 = vmul.f32 %v165, 0.03125
  %v192 = vmul.f32 %v168, 0.03125
  %v193 = vmul.f32 %v171, 0.03125
  %v194 = vmul.f32 %v174, 0.03125
  %v195 = vmul.f32 %v177, 0.03125
  %v196 = vmul.f32 %v180, 0.03125
  %v197 = vadd.f32 %v181, 1e-05
  %v198 = vadd.f32 %v182, 1e-05
  %v199 = vadd.f32 %v183, 1e-05
  %v200 = vadd.f32 %v184, 1e-05
  %v201 = vadd.f32 %v185, 1e-05
  %v202 = vadd.f32 %v186, 1e-05
  %v203 = vadd.f32 %v187, 1e-05
  %v204 = vadd.f32 %v188, 1e-05
  %v205 = vadd.f32 %v189, 1e-05
  %v206 = vadd.f32 %v190, 1e-05
  %v207 = vadd.f32 %v191, 1e-05
  %v208 = vadd.f32 %v192, 1e-05
  %v209 = vadd.f32 %v193, 1e-05
  %v210 = vadd.f32 %v194, 1e-05
  %v211 = vadd.f32 %v195, 1e-05
  %v212 = vadd.f32 %v196, 1e-05
  %v213 = vrsqrt.pop %v197
  %v214 = vmul.f32 %v213, %v197
  %v215 = vmul.f32 %v214, %v213
  %v216 = vmul.f32 0.5, %v215
  %v217 = vsub.f32 1.5, %v216
  %v218 = vmul.f32 %v213, %v217
  %vm219 = vweird.f32 %v197
  %vm220 = vweird.f32 %v213
  %vm221 = vmor %vm219, %vm220
  %v222 = vsel %vm221, %v213, %v218
  %v223 = vrsqrt.pop %v198
  %v224 = vmul.f32 %v223, %v198
  %v225 = vmul.f32 %v224, %v223
  %v226 = vmul.f32 0.5, %v225
  %v227 = vsub.f32 1.5, %v226
  %v228 = vmul.f32 %v223, %v227
  %vm229 = vweird.f32 %v198
  %vm230 = vweird.f32 %v223
  %vm231 = vmor %vm229, %vm230
  %v232 = vsel %vm231, %v223, %v228
  %v233 = vrsqrt.pop %v199
  %v234 = vmul.f32 %v233, %v199
  %v235 = vmul.f32 %v234, %v233
  %v236 = vmul.f32 0.5, %v235
  %v237 = vsub.f32 1.5, %v236
  %v238 = vmul.f32 %v233, %v237
  %vm239 = vweird.f32 %v199
  %vm240 = vweird.f32 %v233
  %vm241 = vmor %vm239, %vm240
  %v242 = vsel %vm241, %v233, %v238
  %v243 = vrsqrt.pop %v200
  %v244 = vmul.f32 %v243, %v200
  %v245 = vmul.f32 %v244, %v243
  %v246 = vmul.f32 0.5, %v245
  %v247 = vsub.f32 1.5, %v246
  %v248 = vmul.f32 %v243, %v247
  %vm249 = vweird.f32 %v200
  %vm250 = vweird.f32 %v243
  %vm251 = vmor %vm249, %vm250
  %v252 = vsel %vm251, %v243, %v248
  %v253 = vrsqrt.pop %v201
  %v254 = vmul.f32 %v253, %v201
  %v255 = vmul.f32 %v254, %v253
  %v256 = vmul.f32 0.5, %v255
  %v257 = vsub.f32 1.5, %v256
  %v258 = vmul.f32 %v253, %v257
  %vm259 = vweird.f32 %v201
  %vm260 = vweird.f32 %v253
  %vm261 = vmor %vm259, %vm260
  %v262 = vsel %vm261, %v253, %v258
  %v263 = vrsqrt.pop %v202
  %v264 = vmul.f32 %v263, %v202
  %v265 = vmul.f32 %v264, %v263
  %v266 = vmul.f32 0.5, %v265
  %v267 = vsub.f32 1.5, %v266
  %v268 = vmul.f32 %v263, %v267
  %vm269 = vweird.f32 %v202
  %vm270 = vweird.f32 %v263
  %vm271 = vmor %vm269, %vm270
  %v272 = vsel %vm271, %v263, %v268
  %v273 = vrsqrt.pop %v203
  %v274 = vmul.f32 %v273, %v203
  %v275 = vmul.f32 %v274, %v273
  %v276 = vmul.f32 0.5, %v275
  %v277 = vsub.f32 1.5, %v276
  %v278 = vmul.f32 %v273, %v277
  %vm279 = vweird.f32 %v203
  %vm280 = vweird.f32 %v273
  %vm281 = vmor %vm279, %vm280
  %v282 = vsel %vm281, %v273, %v278
  %v283 = vrsqrt.pop %v204
  %v284 = vmul.f32 %v283, %v204
  %v285 = vmul.f32 %v284, %v283
  %v286 = vmul.f32 0.5, %v285
  %v287 = vsub.f32 1.5, %v286
  %v288 = vmul.f32 %v283, %v287
  %vm289 = vweird.f32 %v204
  %vm290 = vweird.f32 %v283
  %vm291 = vmor %vm289, %vm290
  %v292 = vsel %vm291, %v283, %v288
  %v293 = vrsqrt.pop %v205
  %v294 = vmul.f32 %v293, %v205
  %v295 = vmul.f32 %v294, %v293
  %v296 = vmul.f32 0.5, %v295
  %v297 = vsub.f32 1.5, %v296
  %v298 = vmul.f32 %v293, %v297
  %vm299 = vweird.f32 %v205
  %vm300 = vweird.f32 %v293
  %vm301 = vmor %vm299, %vm300
  %v302 = vsel %vm301, %v293, %v298
  %v303 = vrsqrt.pop %v206
  %v304 = vmul.f32 %v303, %v206
  %v305 = vmul.f32 %v304, %v303
  %v306 = vmul.f32 0.5, %v305
  %v307 = vsub.f32 1.5, %v306
  %v308 = vmul.f32 %v303, %v307
  %vm309 = vweird.f32 %v206
  %vm310 = vweird.f32 %v303
  %vm311 = vmor %vm309, %vm310
  %v312 = vsel %vm311, %v303, %v308
  %v313 = vrsqrt.pop %v207
  %v314 = vmul.f32 %v313, %v207
  %v315 = vmul.f32 %v314, %v313
  %v316 = vmul.f32 0.5, %v315
  %v317 = vsub.f32 1.5, %v316
  %v318 = vmul.f32 %v313, %v317
  %vm319 = vweird.f32 %v207
  %vm320 = vweird.f32 %v313
  %vm321 = vmor %vm319, %vm320
  %v322 = vsel %vm321, %v313, %v318
  %v323 = vrsqrt.pop %v208
  %v324 = vmul.f32 %v323, %v208
  %v325 = vmul.f32 %v324, %v323
  %v326 = vmul.f32 0.5, %v325
  %v327 = vsub.f32 1.5, %v326
  %v328 = vmul.f32 %v323, %v327
  %vm329 = vweird.f32 %v208
  %vm330 = vweird.f32 %v323
  %vm331 = vmor %vm329, %vm330
  %v332 = vsel %vm331, %v323, %v328
  %v333 = vrsqrt.pop %v209
  %v334 = vmul.f32 %v333, %v209
  %v335 = vmul.f32 %v334, %v333
  %v336 = vmul.f32 0.5, %v335
  %v337 = vsub.f32 1.5, %v336
  %v338 = vmul.f32 %v333, %v337
  %vm339 = vweird.f32 %v209
  %vm340 = vweird.f32 %v333
  %vm341 = vmor %vm339, %vm340
  %v342 = vsel %vm341, %v333, %v338
  %v343 = vrsqrt.pop %v210
  %v344 = vmul.f32 %v343, %v210
  %v345 = vmul.f32 %v344, %v343
  %v346 = vmul.f32 0.5, %v345
  %v347 = vsub.f32 1.5, %v346
  %v348 = vmul.f32 %v343, %v347
  %vm349 = vweird.f32 %v210
  %vm350 = vweird.f32 %v343
  %vm351 = vmor %vm349, %vm350
  %v352 = vsel %vm351, %v343, %v348
  %v353 = vrsqrt.pop %v211
  %v354 = vmul.f32 %v353, %v211
  %v355 = vmul.f32 %v354, %v353
  %v356 = vmul.f32 0.5, %v355
  %v357 = vsub.f32 1.5, %v356
  %v358 = vmul.f32 %v353, %v357
  %vm359 = vweird.f32 %v211
  %vm360 = vweird.f32 %v353
  %vm361 = vmor %vm359, %vm360
  %v362 = vsel %vm361, %v353, %v358
  %v363 = vrsqrt.pop %v212
  %v364 = vmul.f32 %v363, %v212
  %v365 = vmul.f32 %v364, %v363
  %v366 = vmul.f32 0.5, %v365
  %v367 = vsub.f32 1.5, %v366
  %v368 = vmul.f32 %v363, %v367
  %vm369 = vweird.f32 %v212
  %vm370 = vweird.f32 %v363
  %vm371 = vmor %vm369, %vm370
  %v372 = vsel %vm371, %v363, %v368
  %v373 = vmul.f32 %v101, %v222
  %v374 = vmul.f32 %v102, %v232
  %v375 = vmul.f32 %v103, %v242
  %v376 = vmul.f32 %v104, %v252
  %v377 = vmul.f32 %v105, %v262
  %v378 = vmul.f32 %v106, %v272
  %v379 = vmul.f32 %v107, %v282
  %v380 = vmul.f32 %v108, %v292
  %v381 = vmul.f32 %v109, %v302
  %v382 = vmul.f32 %v110, %v312
  %v383 = vmul.f32 %v111, %v322
  %v384 = vmul.f32 %v112, %v332
  %v385 = vmul.f32 %v113, %v342
  %v386 = vmul.f32 %v114, %v352
  %v387 = vmul.f32 %v115, %v362
  %v388 = vmul.f32 %v116, %v372
  %v389 = vld [vmem:[%s1] sm:$0x1]
  %v391 = vperm.slane %v389, 0
  %v393 = vmul.f32 %v373, %v391
  %v394 = vmul.f32 %v374, %v391
  %v395 = vmul.f32 %v375, %v391
  %v396 = vmul.f32 %v376, %v391
  %v397 = vmul.f32 %v377, %v391
  %v398 = vmul.f32 %v378, %v391
  %v399 = vmul.f32 %v379, %v391
  %v400 = vmul.f32 %v380, %v391
  %v401 = vmul.f32 %v381, %v391
  %v402 = vmul.f32 %v382, %v391
  %v403 = vmul.f32 %v383, %v391
  %v404 = vmul.f32 %v384, %v391
  %v405 = vmul.f32 %v385, %v391
  %v406 = vmul.f32 %v386, %v391
  %v407 = vmul.f32 %v387, %v391
  %v408 = vmul.f32 %v388, %v391
  %v409 = vld [vmem:[%s2] sm:$0x1]
  %v411 = vperm.slane %v409, 0
  %v413 = vadd.f32 %v393, %v411
  %v414 = vadd.f32 %v394, %v411
  %v415 = vadd.f32 %v395, %v411
  %v416 = vadd.f32 %v396, %v411
  %v417 = vadd.f32 %v397, %v411
  %v418 = vadd.f32 %v398, %v411
  %v419 = vadd.f32 %v399, %v411
  %v420 = vadd.f32 %v400, %v411
  %v421 = vadd.f32 %v401, %v411
  %v422 = vadd.f32 %v402, %v411
  %v423 = vadd.f32 %v403, %v411
  %v424 = vadd.f32 %v404, %v411
  %v425 = vadd.f32 %v405, %v411
  %v426 = vadd.f32 %v406, %v411
  %v427 = vadd.f32 %v407, %v411
  %v428 = vadd.f32 %v408, %v411
  %v429 = vld [vmem:[%s3] sm:$0xff]
  %v430 = vld [vmem:[%s3 + $0x8] sm:$0xff]
  %v431 = vld [vmem:[%s3 + $0x10] sm:$0xff]
  %v432 = vld [vmem:[%s3 + $0x18] sm:$0xff]
  %v433 = vld [vmem:[%s4] sm:$0x1]
  %v435 = vperm.slane %v433, 0
  %v438 = vsel %vm36, %v413, 0
  %v441 = vsel %vm36, %v414, 0
  %v444 = vsel %vm36, %v415, 0
  %v447 = vsel %vm36, %v416, 0
  %v450 = vsel %vm36, %v417, 0
  %v453 = vsel %vm36, %v418, 0
  %v456 = vsel %vm36, %v419, 0
  %v459 = vsel %vm36, %v420, 0
  %v462 = vsel %vm36, %v421, 0
  %v465 = vsel %vm36, %v422, 0
  %v468 = vsel %vm36, %v423, 0
  %v471 = vsel %vm36, %v424, 0
  %v474 = vsel %vm36, %v425, 0
  %v477 = vsel %vm36, %v426, 0
  %v480 = vsel %vm36, %v427, 0
  %v483 = vsel %vm36, %v428, 0
  %485 = vmatpush.msra.mxu0 0.0
  %486 = vmatpush.msra.mxu0 0.0
  %487 = vmatpush.msra.mxu0 0.0
  %488 = vmatpush.msra.mxu0 0.0
  %489 = vmatpush.msra.mxu0 0.0
  %490 = vmatpush.msra.mxu0 0.0
  %491 = vmatpush.msra.mxu0 0.0
  %492 = vmatpush.msra.mxu0 0.0
  %493 = vmatpush.msra.mxu0 0.0
  %494 = vmatpush.msra.mxu0 0.0
  %495 = vmatpush.msra.mxu0 0.0
  %496 = vmatpush.msra.mxu0 0.0
  %497 = vmatpush.msra.mxu0 %v432
  %498 = vmatpush.msra.mxu0 %v431
  %499 = vmatpush.msra.mxu0 %v430
  %500 = vmatpush.msra.mxu0 %v429
  %501 = vmatmul.f32.gmra.mxu0 %v438
  %v502 = vpop.f32.mrf.mxu0
  %v503 = vadd.f32 %v435, %v502
  %504 = vmatmul.f32.gmra.mxu0 %v441
  %v505 = vpop.f32.mrf.mxu0
  %v506 = vadd.f32 %v435, %v505
  %507 = vmatmul.f32.gmra.mxu0 %v444
  %v508 = vpop.f32.mrf.mxu0
  %v509 = vadd.f32 %v435, %v508
  %510 = vmatmul.f32.gmra.mxu0 %v447
  %v511 = vpop.f32.mrf.mxu0
  %v512 = vadd.f32 %v435, %v511
  %513 = vmatmul.f32.gmra.mxu0 %v450
  %v514 = vpop.f32.mrf.mxu0
  %v515 = vadd.f32 %v435, %v514
  %516 = vmatmul.f32.gmra.mxu0 %v453
  %v517 = vpop.f32.mrf.mxu0
  %v518 = vadd.f32 %v435, %v517
  %519 = vmatmul.f32.gmra.mxu0 %v456
  %v520 = vpop.f32.mrf.mxu0
  %v521 = vadd.f32 %v435, %v520
  %522 = vmatmul.f32.gmra.mxu0 %v459
  %v523 = vpop.f32.mrf.mxu0
  %v524 = vadd.f32 %v435, %v523
  %525 = vmatmul.f32.gmra.mxu0 %v462
  %v526 = vpop.f32.mrf.mxu0
  %v527 = vadd.f32 %v435, %v526
  %528 = vmatmul.f32.gmra.mxu0 %v465
  %v529 = vpop.f32.mrf.mxu0
  %v530 = vadd.f32 %v435, %v529
  %531 = vmatmul.f32.gmra.mxu0 %v468
  %v532 = vpop.f32.mrf.mxu0
  %v533 = vadd.f32 %v435, %v532
  %534 = vmatmul.f32.gmra.mxu0 %v471
  %v535 = vpop.f32.mrf.mxu0
  %v536 = vadd.f32 %v435, %v535
  %537 = vmatmul.f32.gmra.mxu0 %v474
  %v538 = vpop.f32.mrf.mxu0
  %v539 = vadd.f32 %v435, %v538
  %540 = vmatmul.f32.gmra.mxu0 %v477
  %v541 = vpop.f32.mrf.mxu0
  %v542 = vadd.f32 %v435, %v541
  %543 = vmatmul.f32.gmra.mxu0 %v480
  %v544 = vpop.f32.mrf.mxu0
  %v545 = vadd.f32 %v435, %v544
  %546 = vmatmul.f32.gmra.mxu0 %v483
  %v547 = vpop.f32.mrf.mxu0
  %v548 = vadd.f32 %v435, %v547
  %549 = vdwg.mxu0
  %550 = vst.msk [vmem:[%s5] sm:$0xff] %vm36, %v503
  %551 = vst.msk [vmem:[%s5 + $0x8] sm:$0xff] %vm36, %v506
  %552 = vst.msk [vmem:[%s5 + $0x10] sm:$0xff] %vm36, %v509
  %553 = vst.msk [vmem:[%s5 + $0x18] sm:$0xff] %vm36, %v512
  %554 = vst.msk [vmem:[%s5 + $0x20] sm:$0xff] %vm36, %v515
  %555 = vst.msk [vmem:[%s5 + $0x28] sm:$0xff] %vm36, %v518
  %556 = vst.msk [vmem:[%s5 + $0x30] sm:$0xff] %vm36, %v521
  %557 = vst.msk [vmem:[%s5 + $0x38] sm:$0xff] %vm36, %v524
  %558 = vst.msk [vmem:[%s5 + $0x40] sm:$0xff] %vm36, %v527
  %559 = vst.msk [vmem:[%s5 + $0x48] sm:$0xff] %vm36, %v530
  %560 = vst.msk [vmem:[%s5 + $0x50] sm:$0xff] %vm36, %v533
  %561 = vst.msk [vmem:[%s5 + $0x58] sm:$0xff] %vm36, %v536
  %562 = vst.msk [vmem:[%s5 + $0x60] sm:$0xff] %vm36, %v539
  %563 = vst.msk [vmem:[%s5 + $0x68] sm:$0xff] %vm36, %v542
  %564 = vst.msk [vmem:[%s5 + $0x70] sm:$0xff] %vm36, %v545
  %565 = vst.msk [vmem:[%s5 + $0x78] sm:$0xff] %vm36, %v548
  // Predicated region
  $region22: #{tpu_custom_call.1} parent=0 // pred_check
    _
  $region23: #{tpu_custom_call.1} parent=0 // pred_check_branch
    %567 = sbr.rel (0) target = $region25
  $region24: #{tpu_custom_call.1} parent=0 // pred_region
    _
  $region25: #{tpu_custom_call.1} parent=0 // pred_fallthru
    _
  // Predicated region
  $region26: #{tpu_custom_call.1} parent=0 // pred_check
    _
  $region27: #{tpu_custom_call.1} parent=0 // pred_check_branch
    %569 = sbr.rel (0) target = $region29
  $region28: #{tpu_custom_call.1} parent=0 // pred_region
    _
  $region29: #{tpu_custom_call.1} parent=0 // pred_fallthru
    _

</llo_original>
